<compile_context>
chip_gen: v6e
topology: v6e:2x2x1
jax: 0.10.0
libtpu: 0.0.40
codegen_flags: <defaults>
</compile_context>

<pallas_src>
import functools

import jax
import jax.numpy as jnp
from jax.experimental import pallas as pl
from jax.experimental.pallas import tpu as pltpu


def _update_kernel(h_ref, m_ref, w1_ref, w2_ref, b_ref, o_ref,
                   *, compute_dtype, fuse_concat):
    H = w2_ref.shape[0]
    # Cast MXU operands in-kernel (no wrapper-side HBM copy of h / m / weights).
    h = h_ref[...].astype(compute_dtype)
    m = m_ref[...].astype(compute_dtype)
    w1 = w1_ref[...].astype(compute_dtype)
    b = b_ref[...]  # [2, H] f32: row 0 = b1, row 1 = b2

    # ---- Layer 1: concat([h, m]) @ W1 + b1, f32 accumulation ----
    if fuse_concat:
        # v6e / v7x: one K = 2H matmul exactly fills the 256-deep MXU.
        x = jnp.concatenate([h, m], axis=1)                      # [tile_n, 2H]
        z = jnp.dot(x, w1, preferred_element_type=jnp.float32)
    else:
        # v5e: K = H already fills the 128-deep MXU; skip the lane concat.
        z = jnp.dot(h, w1[0:H, :], preferred_element_type=jnp.float32)
        z = z + jnp.dot(m, w1[H:2 * H, :], preferred_element_type=jnp.float32)
    z = z + b[0:1, :]
    z = jnp.maximum(z, 0.0)                                       # ReLU (f32)

    # ---- Layer 2 ----
    out = jnp.dot(z.astype(compute_dtype),
                  w2_ref[...].astype(compute_dtype),
                  preferred_element_type=jnp.float32)
    out = out + b[1:2, :]
    o_ref[...] = out.astype(o_ref.dtype)


def _tpu_generation():
    """Best-effort TPU generation number (None if unknown)."""
    try:
        kind = jax.devices()[0].device_kind.lower()
    except Exception:
        return None
    for g in (7, 6, 5, 4, 3, 2):
        if f"v{g}" in kind:
            return g
    return None


def _default_tile_n(n_rows, in_itemsize, num_tc):
    """Row tile: >= 2 grid steps per TensorCore (prefetch/writeback overlap),
    capped so per-buffer VMEM stays small while near the HBM roofline."""
    cap = 2048 if in_itemsize <= 2 else 1024
    min_steps = 2 * max(1, num_tc)
    tile = min(cap, max(8, pl.cdiv(n_rows, min_steps)))
    return int(((tile + 7) // 8) * 8)


@functools.partial(jax.jit,
                   static_argnames=("tile_n", "compute_dtype", "fuse_concat"))
def update_function(h_i, m_i, w1, b1, w2, b2, *,
                    tile_n=None, compute_dtype=jnp.bfloat16, fuse_concat=None):
    """Pallas equivalent of UpdateFunction.forward.

    Args:
      h_i: [N, H] current node features.
      m_i: [N, H] aggregated messages.
      w1:  [2H, H] first linear weights, pre-transposed ([in, out]).
      b1:  [H]     first linear bias.
      w2:  [H, H]  second linear weights, pre-transposed ([in, out]).
      b2:  [H]     second linear bias.
      compute_dtype: MXU operand dtype (bf16 default; accumulation is f32).
      fuse_concat: force single K=2H layer-1 matmul (None -> per-generation).
    Returns:
      [N, H] updated node features (dtype of h_i).
    """
    N, H = h_i.shape
    assert m_i.shape == (N, H)
    assert w1.shape == (2 * H, H)
    assert b1.shape == (H,)
    assert w2.shape == (H, H)
    assert b2.shape == (H,)

    out_dtype = h_i.dtype
    gen = _tpu_generation()
    if fuse_concat is None:
        fuse_concat = (gen is None) or (gen >= 6)   # 256-deep MXU on v6e/v7x
    num_tc = 2 if (gen is not None and gen >= 7) else 1

    h_b = jnp.dtype(h_i.dtype).itemsize
    m_b = jnp.dtype(m_i.dtype).itemsize
    if tile_n is None:
        tile_n = _default_tile_n(N, max(h_b, m_b), num_tc)
    tile_n = int(tile_n)

    # Ragged last tile handled by Pallas partial-block semantics
    # (rows are independent; OOB reads padded, OOB writes dropped).
    grid = (pl.cdiv(N, tile_n),)

    # Merge biases into a single tiny [2, H] f32 block (one DMA stream).
    b12 = jnp.stack([b1, b2], axis=0).astype(jnp.float32)

    row_spec = pl.BlockSpec((tile_n, H), lambda i: (i, 0))
    w1_spec = pl.BlockSpec((2 * H, H), lambda i: (0, 0))   # resident
    w2_spec = pl.BlockSpec((H, H), lambda i: (0, 0))       # resident
    b_spec = pl.BlockSpec((2, H), lambda i: (0, 0))        # resident

    out_b = jnp.dtype(out_dtype).itemsize
    cmp_b = jnp.dtype(compute_dtype).itemsize
    w1_b = jnp.dtype(w1.dtype).itemsize
    w2_b = jnp.dtype(w2.dtype).itemsize

    # VMEM estimate: double-buffered activations/output, resident weights,
    # in-kernel casted weights, concat scratch, f32 intermediates.
    vmem_est = (
        2 * tile_n * H * (h_b + m_b)
        + 2 * tile_n * H * out_b
        + 2 * (2 * H) * H * w1_b + 2 * H * H * w2_b + 2 * 2 * H * 4
        + (2 * H) * H * cmp_b + H * H * cmp_b
        + tile_n * (2 * H) * cmp_b
        + 2 * tile_n * H * 4
    )
    # Cap at 48 MiB: leaves headroom on v7x (64 MiB/TC) and is far below
    # v5e/v6e's 128 MiB.
    vmem_limit = int(min(48 * 1024 * 1024, max(4 * 1024 * 1024, 2 * vmem_est)))

    flops = 6 * N * H * H
    bytes_accessed = (N * H * (h_b + m_b + out_b)
                      + (2 * H) * H * w1_b + H * H * w2_b + 2 * H * 4)
    cost = pl.CostEstimate(flops=flops, transcendentals=0,
                           bytes_accessed=bytes_accessed)

    kernel = functools.partial(_update_kernel,
                               compute_dtype=jnp.dtype(compute_dtype),
                               fuse_concat=bool(fuse_concat))

    return pl.pallas_call(
        kernel,
        out_shape=jax.ShapeDtypeStruct((N, H), out_dtype),
        grid=grid,
        in_specs=[row_spec, row_spec, w1_spec, w2_spec, b_spec],
        out_specs=row_spec,
        compiler_params=pltpu.CompilerParams(
            dimension_semantics=("parallel",),
            vmem_limit_bytes=vmem_limit,
        ),
        cost_estimate=cost,
    )(h_i, m_i, w1, w2, b12)


def _reference(h_i, m_i, w1, b1, w2, b2):
    x = jnp.concatenate([h_i, m_i], axis=1)
    z = jnp.maximum(
        jnp.dot(x, w1, precision=jax.lax.Precision.HIGHEST) + b1, 0.0)
    return jnp.dot(z, w2, precision=jax.lax.Precision.HIGHEST) + b2


if __name__ == "__main__":
    # hidden_dim = 128 (module default, lane-dense); N = 200 nodes exercises
    # the ragged last row-tile (no wrapper pad/slice needed).
    N, H = 200, 128

    key = jax.random.PRNGKey(0)
    k_h, k_m, k_w1, k_b1, k_w2, k_b2 = jax.random.split(key, 6)

    h_i = jax.random.normal(k_h, (N, H), dtype=jnp.float32)
    m_i = jax.random.normal(k_m, (N, H), dtype=jnp.float32)

    # PyTorch Linear-style uniform init, stored pre-transposed [in, out].
    bound1 = 1.0 / jnp.sqrt(2.0 * H)
    w1 = jax.random.uniform(k_w1, (2 * H, H), minval=-bound1, maxval=bound1,
                            dtype=jnp.float32)
    b1 = jax.random.uniform(k_b1, (H,), minval=-bound1, maxval=bound1,
                            dtype=jnp.float32)
    bound2 = 1.0 / jnp.sqrt(1.0 * H)
    w2 = jax.random.uniform(k_w2, (H, H), minval=-bound2, maxval=bound2,
                            dtype=jnp.float32)
    b2 = jax.random.uniform(k_b2, (H,), minval=-bound2, maxval=bound2,
                            dtype=jnp.float32)

    ref = _reference(h_i, m_i, w1, b1, w2, b2)

    # 1) f32 MXU path, both layer-1 variants (fused K=2H and split K=H): tight check.
    for fuse in (False, True):
        out_f32 = jax.block_until_ready(
            update_function(h_i, m_i, w1, b1, w2, b2,
                            compute_dtype=jnp.float32, fuse_concat=fuse))
        assert out_f32.shape == (N, H)
        assert jnp.allclose(out_f32, ref, atol=1e-4, rtol=1e-4), \
            f"f32 mismatch vs reference (fuse_concat={fuse})"

    # 2) Default bf16 MXU path (f32 accumulation, in-kernel cast): loose check.
    out_bf16 = jax.block_until_ready(update_function(h_i, m_i, w1, b1, w2, b2))
    assert out_bf16.shape == (N, H)
    assert out_bf16.dtype == h_i.dtype
    assert bool(jnp.all(jnp.isfinite(out_bf16)))
    assert jnp.allclose(out_bf16, ref, atol=1e-1, rtol=5e-2), \
        "bf16 path deviates too far from f32 reference"

    print("KERNEL_OK")
</pallas_src>

<mosaic_0001>
module attributes {stable_mosaic.version = 11 : i64} {
  func.func @_update_kernel(%arg0: i32, %arg1: memref<104x128xf32, #tpu.memory_space<vmem>>, %arg2: memref<104x128xf32, #tpu.memory_space<vmem>>, %arg3: memref<256x128xf32, #tpu.memory_space<vmem>>, %arg4: memref<128x128xf32, #tpu.memory_space<vmem>>, %arg5: memref<2x128xf32, #tpu.memory_space<vmem>>, %arg6: memref<104x128xf32, #tpu.memory_space<vmem>>) attributes {dimension_semantics = [#tpu.dimension_semantics<parallel>], iteration_bounds = array<i64: 2>, scalar_prefetch = 0 : i64, scratch_operands = 0 : i64, tpu.core_type = #tpu.core_type<tc>, window_params = [{transform_indices = @transform_0, window_bounds = array<i64: 104, 128>}, {transform_indices = @transform_1, window_bounds = array<i64: 104, 128>}, {pipeline_mode = #tpu.pipeline_mode<synchronous>, transform_indices = @transform_2, window_bounds = array<i64: 256, 128>}, {pipeline_mode = #tpu.pipeline_mode<synchronous>, transform_indices = @transform_3, window_bounds = array<i64: 128, 128>}, {pipeline_mode = #tpu.pipeline_mode<synchronous>, transform_indices = @transform_4, window_bounds = array<i64: 2, 128>}, {transform_indices = @transform_5, window_bounds = array<i64: 104, 128>}]} {
    %c0 = arith.constant 0 : index
    %c0_0 = arith.constant 0 : index
    %0 = vector.load %arg1[%c0, %c0_0] : memref<104x128xf32, #tpu.memory_space<vmem>>, vector<104x128xf32>
    %c0_1 = arith.constant 0 : index
    %c0_2 = arith.constant 0 : index
    %1 = vector.load %arg2[%c0_1, %c0_2] : memref<104x128xf32, #tpu.memory_space<vmem>>, vector<104x128xf32>
    %c0_3 = arith.constant 0 : index
    %c0_4 = arith.constant 0 : index
    %2 = vector.load %arg3[%c0_3, %c0_4] : memref<256x128xf32, #tpu.memory_space<vmem>>, vector<256x128xf32>
    %c0_5 = arith.constant 0 : index
    %c0_6 = arith.constant 0 : index
    %3 = vector.load %arg5[%c0_5, %c0_6] : memref<2x128xf32, #tpu.memory_space<vmem>>, vector<2x128xf32>
    %4 = vector.extract_strided_slice %2 {offsets = [0, 0], sizes = [128, 128], strides = [1, 1]} : vector<256x128xf32> to vector<128x128xf32>
    %cst = arith.constant dense<0.000000e+00> : vector<104x128xf32>
    %5 = tpu.matmul %0, %4, %cst {dimension_numbers = #tpu.dot_dimension_numbers<[1], [0], [0], [1], [0, 0, 1, 1], [], []>} : vector<104x128xf32>, vector<128x128xf32>, vector<104x128xf32> -> vector<104x128xf32>
    %6 = vector.extract_strided_slice %2 {offsets = [128, 0], sizes = [128, 128], strides = [1, 1]} : vector<256x128xf32> to vector<128x128xf32>
    %cst_7 = arith.constant dense<0.000000e+00> : vector<104x128xf32>
    %7 = tpu.matmul %1, %6, %cst_7 {dimension_numbers = #tpu.dot_dimension_numbers<[1], [0], [0], [1], [0, 0, 1, 1], [], []>} : vector<104x128xf32>, vector<128x128xf32>, vector<104x128xf32> -> vector<104x128xf32>
    %8 = arith.addf %5, %7 : vector<104x128xf32>
    %9 = vector.extract_strided_slice %3 {offsets = [0, 0], sizes = [1, 128], strides = [1, 1]} : vector<2x128xf32> to vector<1x128xf32>
    %10 = vector.broadcast %9 : vector<1x128xf32> to vector<104x128xf32>
    %11 = arith.addf %8, %10 : vector<104x128xf32>
    %cst_8 = arith.constant 0.000000e+00 : f32
    %12 = vector.broadcast %cst_8 : f32 to vector<104x128xf32>
    %13 = arith.maximumf %11, %12 : vector<104x128xf32>
    %c0_9 = arith.constant 0 : index
    %c0_10 = arith.constant 0 : index
    %14 = vector.load %arg4[%c0_9, %c0_10] : memref<128x128xf32, #tpu.memory_space<vmem>>, vector<128x128xf32>
    %cst_11 = arith.constant dense<0.000000e+00> : vector<104x128xf32>
    %15 = tpu.matmul %13, %14, %cst_11 {dimension_numbers = #tpu.dot_dimension_numbers<[1], [0], [0], [1], [0, 0, 1, 1], [], []>} : vector<104x128xf32>, vector<128x128xf32>, vector<104x128xf32> -> vector<104x128xf32>
    %16 = vector.extract_strided_slice %3 {offsets = [1, 0], sizes = [1, 128], strides = [1, 1]} : vector<2x128xf32> to vector<1x128xf32>
    %17 = vector.broadcast %16 : vector<1x128xf32> to vector<104x128xf32>
    %18 = arith.addf %15, %17 : vector<104x128xf32>
    %c0_12 = arith.constant 0 : index
    %c0_13 = arith.constant 0 : index
    %19 = vector.load %arg6[%c0_12, %c0_13] : memref<104x128xf32, #tpu.memory_space<vmem>>, vector<104x128xf32>
    tpu.vector_store %arg6[%c0_12, %c0_13], %18 {strides = array<i32>} : memref<104x128xf32, #tpu.memory_space<vmem>>, vector<104x128xf32>,
    return
  }
  func.func @transform_0(%arg0: i32) -> (i32, i32) {
    %c0_i32 = arith.constant 0 : i32
    %c0_i32_0 = arith.constant 0 : i32
    return %arg0, %c0_i32 : i32, i32
  }
  func.func @transform_1(%arg0: i32) -> (i32, i32) {
    %c0_i32 = arith.constant 0 : i32
    %c0_i32_0 = arith.constant 0 : i32
    return %arg0, %c0_i32 : i32, i32
  }
  func.func @transform_2(%arg0: i32) -> (i32, i32) {
    %c0_i32 = arith.constant 0 : i32
    %c0_i32_0 = arith.constant 0 : i32
    %c0_i32_1 = arith.constant 0 : i32
    return %c0_i32, %c0_i32_0 : i32, i32
  }
  func.func @transform_3(%arg0: i32) -> (i32, i32) {
    %c0_i32 = arith.constant 0 : i32
    %c0_i32_0 = arith.constant 0 : i32
    %c0_i32_1 = arith.constant 0 : i32
    return %c0_i32, %c0_i32_0 : i32, i32
  }
  func.func @transform_4(%arg0: i32) -> (i32, i32) {
    %c0_i32 = arith.constant 0 : i32
    %c0_i32_0 = arith.constant 0 : i32
    %c0_i32_1 = arith.constant 0 : i32
    return %c0_i32, %c0_i32_0 : i32, i32
  }
  func.func @transform_5(%arg0: i32) -> (i32, i32) {
    %c0_i32 = arith.constant 0 : i32
    %c0_i32_0 = arith.constant 0 : i32
    return %arg0, %c0_i32 : i32, i32
  }
}

</mosaic_0001>

<llo_original>
// kernel: update_function.1
$region0: #{update_function.1}
  #allocation0 [shape = 'u32[]', space=smem, size = 0x4, offset = 0x4, fixed_abs, tag = 'smem constant byte address 0x4 - core index']
  #allocation1 [shape = 'u32[144,128]{1,0:T(1,128)}', space=vmem, size = 0x12000, scoped, tag = 'internal scratch']
  %s0 = inlined_call_operand.hbm [shape: f32[200,128], index: 0, kind: input, shape index: {}]
  %s1 = inlined_call_operand.hbm [shape: f32[200,128], index: 1, kind: input, shape index: {}]
  %s2 = inlined_call_operand.hbm [shape: f32[256,128], index: 2, kind: input, shape index: {}]
  %s3 = inlined_call_operand.hbm [shape: f32[128,128], index: 3, kind: input, shape index: {}]
  %s4 = inlined_call_operand.vmem [shape: f32[2,128], index: 4, kind: input, shape index: {}]
  %s5 = inlined_call_operand.hbm [shape: f32[200,128], index: 5, kind: output, shape index: {}]
  %s6 = sld [smem:[#allocation0]]
  $region69: #{update_function.1} parent=0
    _
  %s8 = ssub.s32 1, %s6
  %s9 = scalar_select 0, %s8, %s6
  $region1: #{update_function.1} parent=0
    #allocation2 [shape = 'u8[106496]{0}', space=vmem, size = 0x1a000, scoped, tag = 'input window, operand 0']
    #allocation3 [shape = 's32[2]{0}', space=sflag, size = 0x8, scoped, tag = 'scoped memory for update_function.1']
    #allocation4 [shape = 's32[2]{0}', space=sflag, size = 0x8, scoped, tag = 'scoped memory for update_function.1']
    #allocation5 [shape = 'u8[106496]{0}', space=vmem, size = 0x1a000, scoped, tag = 'input window, operand 1']
    #allocation6 [shape = 's32[2]{0}', space=sflag, size = 0x8, scoped, tag = 'scoped memory for update_function.1']
    #allocation7 [shape = 'u8[131072]{0}', space=vmem, size = 0x20000, scoped, tag = 'input window, operand 2, single buffered']
    #allocation8 [shape = 'u8[65536]{0}', space=vmem, size = 0x10000, scoped, tag = 'input window, operand 3, single buffered']
    #allocation9 [shape = 's32[1]{0}', space=sflag, size = 0x4, scoped, tag = 'scoped memory for update_function.1']
    #allocation10 [shape = 'u8[106496]{0}', space=vmem, size = 0x1a000, scoped, tag = 'output window, operand 0']
    %10 = vsyncpa [#allocation3], 0
    %s11 = scalar_lea.sflag [#allocation3], 1
    %12 = vsyncpa %s11, 0
    %13 = vsyncpa [#allocation6], 0
    %s14 = scalar_lea.sflag [#allocation6], 1
    %15 = vsyncpa %s14, 0
    %16 = vsyncpa [#allocation9], 0
    %17 = vsyncpa [#allocation4], 0
    %s18 = scalar_lea.sflag [#allocation4], 1
    %19 = vsyncpa %s18, 0
    loop: start=0, step=1, limit=4
    $region2: #{update_function.1} parent=1 // loop_pre_header
      _
    $region3: #{update_function.1} parent=1 // loop_header
      %s21 = sphi 0, %s25
      %p22 = scmp.ge.s32.totalorder %s21, 4
      %s31 = sphi 0, %s33
      %s34 = sphi 0, %s31
      %s35 = sphi 0, %s34
      %s51 = sphi 0, %s35
      %s57 = sphi 0, %s59
      %s60 = sphi 0, %s57
      %s61 = sphi 0, %s60
      %s77 = sphi 0, %s61
      %s81 = sphi 0, %s81
      %s83 = sphi 0, %s81
      %s84 = sphi 0, %s83
      %s98 = sphi 0, %s84
      %s102 = sphi 0, %s102
      %s104 = sphi 0, %s102
      %s105 = sphi 0, %s104
      %s119 = sphi 0, %s105
      %s123 = sphi 0, %s123
      %s125 = sphi 0, %s123
      %s126 = sphi 0, %s125
      %s140 = sphi 0, %s126
      %s146 = sphi 0, %s148
      %s149 = sphi 0, %s146
      %s150 = sphi 0, %s149
      %s166 = sphi 0, %s150
    $region4: #{update_function.1} parent=1 // loop_header_branch
      %24 = sbr.rel (%p22) target = $region8
    $region5: #{update_function.1} parent=1 // loop_body
      %s26 = ssub.s32 %s21, 1
      %s27 = ssub.s32 %s21, 2
      %s28 = sadd.s32 %s21, 1
      %s29 = ssub.s32 %s21, %s28
      %p30 = scmp.eq.s32.totalorder %s29, 0
      %s32 = sadd.s32 %s31, 1
      %s33 = scalar_select %p30, %s31, %s32
      %p36 = pneg %p30
      %p37 = scmp.eq.s32.totalorder %s21, 1
      %p38 = por %p36, %p37
      %p39 = scmp.ne.s32.totalorder %s31, %s34
      %p40 = scmp.eq.s32.totalorder %s21, 0
      %p41 = por %p39, %p40
      %p42 = scmp.ne.s32.totalorder %s31, %s34
      %p43 = scmp.eq.s32.totalorder %s26, 1
      %p44 = por %p42, %p43
      %p45 = scmp.ne.s32.totalorder %s34, %s35
      %p46 = scmp.eq.s32.totalorder %s26, 0
      %p47 = por %p45, %p46
      %p48 = scmp.ne.s32.totalorder %s34, %s35
      %p49 = scmp.eq.s32.totalorder %s27, 1
      %p50 = por %p48, %p49
      %p52 = scmp.ne.s32.totalorder %s35, %s51
      %p53 = scmp.eq.s32.totalorder %s27, 0
      %p54 = por %p52, %p53
      %s55 = ssub.s32 %s21, %s28
      %p56 = scmp.eq.s32.totalorder %s55, 0
      %s58 = sadd.s32 %s57, 1
      %s59 = scalar_select %p56, %s57, %s58
      %p62 = pneg %p56
      %p63 = scmp.eq.s32.totalorder %s21, 1
      %p64 = por %p62, %p63
      %p65 = scmp.ne.s32.totalorder %s57, %s60
      %p66 = scmp.eq.s32.totalorder %s21, 0
      %p67 = por %p65, %p66
      %p68 = scmp.ne.s32.totalorder %s57, %s60
      %p69 = scmp.eq.s32.totalorder %s26, 1
      %p70 = por %p68, %p69
      %p71 = scmp.ne.s32.totalorder %s60, %s61
      %p72 = scmp.eq.s32.totalorder %s26, 0
      %p73 = por %p71, %p72
      %p74 = scmp.ne.s32.totalorder %s60, %s61
      %p75 = scmp.eq.s32.totalorder %s27, 1
      %p76 = por %p74, %p75
      %p78 = scmp.ne.s32.totalorder %s61, %s77
      %p79 = scmp.eq.s32.totalorder %s27, 0
      %p80 = por %p78, %p79
      %s82 = sadd.s32 %s81, 1
      %p85 = scmp.eq.s32.totalorder %s21, 1
      %p86 = scmp.ne.s32.totalorder %s81, %s83
      %p87 = scmp.eq.s32.totalorder %s21, 0
      %p88 = por %p86, %p87
      %p89 = scmp.ne.s32.totalorder %s81, %s83
      %p90 = scmp.eq.s32.totalorder %s26, 1
      %p91 = por %p89, %p90
      %p92 = scmp.ne.s32.totalorder %s83, %s84
      %p93 = scmp.eq.s32.totalorder %s26, 0
      %p94 = por %p92, %p93
      %p95 = scmp.ne.s32.totalorder %s83, %s84
      %p96 = scmp.eq.s32.totalorder %s27, 1
      %p97 = por %p95, %p96
      %p99 = scmp.ne.s32.totalorder %s84, %s98
      %p100 = scmp.eq.s32.totalorder %s27, 0
      %p101 = por %p99, %p100
      %s103 = sadd.s32 %s102, 1
      %p106 = scmp.eq.s32.totalorder %s21, 1
      %p107 = scmp.ne.s32.totalorder %s102, %s104
      %p108 = scmp.eq.s32.totalorder %s21, 0
      %p109 = por %p107, %p108
      %p110 = scmp.ne.s32.totalorder %s102, %s104
      %p111 = scmp.eq.s32.totalorder %s26, 1
      %p112 = por %p110, %p111
      %p113 = scmp.ne.s32.totalorder %s104, %s105
      %p114 = scmp.eq.s32.totalorder %s26, 0
      %p115 = por %p113, %p114
      %p116 = scmp.ne.s32.totalorder %s104, %s105
      %p117 = scmp.eq.s32.totalorder %s27, 1
      %p118 = por %p116, %p117
      %p120 = scmp.ne.s32.totalorder %s105, %s119
      %p121 = scmp.eq.s32.totalorder %s27, 0
      %p122 = por %p120, %p121
      %s124 = sadd.s32 %s123, 1
      %p127 = scmp.eq.s32.totalorder %s21, 1
      %p128 = scmp.ne.s32.totalorder %s123, %s125
      %p129 = scmp.eq.s32.totalorder %s21, 0
      %p130 = por %p128, %p129
      %p131 = scmp.ne.s32.totalorder %s123, %s125
      %p132 = scmp.eq.s32.totalorder %s26, 1
      %p133 = por %p131, %p132
      %p134 = scmp.ne.s32.totalorder %s125, %s126
      %p135 = scmp.eq.s32.totalorder %s26, 0
      %p136 = por %p134, %p135
      %p137 = scmp.ne.s32.totalorder %s125, %s126
      %p138 = scmp.eq.s32.totalorder %s27, 1
      %p139 = por %p137, %p138
      %p141 = scmp.ne.s32.totalorder %s126, %s140
      %p142 = scmp.eq.s32.totalorder %s27, 0
      %p143 = por %p141, %p142
      %s144 = ssub.s32 %s21, %s28
      %p145 = scmp.eq.s32.totalorder %s144, 0
      %s147 = sadd.s32 %s146, 1
      %s148 = scalar_select %p145, %s146, %s147
      %p151 = pneg %p145
      %p152 = scmp.eq.s32.totalorder %s21, 1
      %p153 = por %p151, %p152
      %p154 = scmp.ne.s32.totalorder %s146, %s149
      %p155 = scmp.eq.s32.totalorder %s21, 0
      %p156 = por %p154, %p155
      %p157 = scmp.ne.s32.totalorder %s146, %s149
      %p158 = scmp.eq.s32.totalorder %s26, 1
      %p159 = por %p157, %p158
      %p160 = scmp.ne.s32.totalorder %s149, %s150
      %p161 = scmp.eq.s32.totalorder %s26, 0
      %p162 = por %p160, %p161
      %p163 = scmp.ne.s32.totalorder %s149, %s150
      %p164 = scmp.eq.s32.totalorder %s27, 1
      %p165 = por %p163, %p164
      %p167 = scmp.ne.s32.totalorder %s150, %s166
      %p168 = scmp.eq.s32.totalorder %s27, 0
      %p169 = por %p167, %p168
      %p170 = scmp.le.s32.totalorder 1, %s21
      %p171 = scmp.lt.s32.totalorder %s21, 3
      %p172 = pnand %p170, %p171
      %p173 = pneg %p172
      // Predicated region
      $region9: #{update_function.1} parent=5 // pred_check
        _
      $region10: #{update_function.1} parent=5 // pred_check_branch
        %175 = sbr.rel (%p172) target = $region12
      $region11: #{update_function.1} parent=5 // pred_region
        %s176 = ssub.s32 %s21, 1
        // Predicated region
        $region13: #{update_function.1} parent=11 // pred_check
          %p177 = pneg %p94
        $region14: #{update_function.1} parent=11 // pred_check_branch
          %179 = sbr.rel (%p177) target = $region16
        $region15: #{update_function.1} parent=11 // pred_region
          %s181 = ssub.s32 4096, 4096
          %182 = vsyncadd [#allocation6], %s181
          %s183 = sshll.u32 [#allocation7], 4
          %s184 = int_to_ptr.vmem [resolvable:$true] %s183
          %189 = dma.hbm_to_vmem [thread:$0]  %s2, 4096, %s184, [#allocation6], 128, 128, 8
        $region16: #{update_function.1} parent=11 // pred_fallthru
          _
        // Predicated region
        $region17: #{update_function.1} parent=11 // pred_check
          %p190 = pneg %p115
        $region18: #{update_function.1} parent=11 // pred_check_branch
          %192 = sbr.rel (%p190) target = $region20
        $region19: #{update_function.1} parent=11 // pred_region
          %s194 = ssub.s32 2048, 2048
          %195 = vsyncadd [#allocation9], %s194
          %s196 = sshll.u32 [#allocation8], 4
          %s197 = int_to_ptr.vmem [resolvable:$true] %s196
          %202 = dma.hbm_to_vmem [thread:$0]  %s3, 2048, %s197, [#allocation9], 128, 128, 8
        $region20: #{update_function.1} parent=11 // pred_fallthru
          _
        // Predicated region
        $region21: #{update_function.1} parent=11 // pred_check
          %p203 = pneg %p136
        $region22: #{update_function.1} parent=11 // pred_check_branch
          %205 = sbr.rel (%p203) target = $region24
        $region23: #{update_function.1} parent=11 // pred_region
          _
        $region24: #{update_function.1} parent=11 // pred_fallthru
          _
      $region12: #{update_function.1} parent=5 // pred_fallthru
        _
      %p206 = scmp.lt.s32.totalorder %s21, 2
      // Predicated region
      $region25: #{update_function.1} parent=5 // pred_check
        %p207 = pneg %p206
      $region26: #{update_function.1} parent=5 // pred_check_branch
        %209 = sbr.rel (%p207) target = $region28
      $region27: #{update_function.1} parent=5 // pred_region
        // Predicated region
        $region29: #{update_function.1} parent=27 // pred_check
          %p210 = pneg %p41
        $region30: #{update_function.1} parent=27 // pred_check_branch
          %212 = sbr.rel (%p210) target = $region32
        $region31: #{update_function.1} parent=27 // pred_region
          %s213 = sand.u32 %s31, 1
          %s214 = scalar_lea.sflag [#allocation3], %s213
          %s215 = sand.u32 %s31, 1
          %s216 = smul.addr %s215, 104
          %s217 = scalar_lea.vmem [#allocation2], %s216
          %s218 = smul.u32 13, %s21
          %s219 = ssub.s32 25, %s218
          %p220 = scmp.lt.s32.totalorder %s219, 13
          %s221 = scalar_select %p220, %s219, 13
          %s222 = smul.u32 128, %s221
          %s224 = ssub.s32 1664, %s222
          %225 = vsyncadd %s214, %s224
          %p226 = scmp.ne.s32.totalorder 0, %s222
          %s227 = smul.addr %s218, 128
          %s228 = scalar_lea.hbm %s0, %s227
          %s229 = smul.u32 8, %s221
          %s230 = sshll.u32 %s217, 4
          %s231 = int_to_ptr.vmem [resolvable:$true] %s230
          %s232 = sshll.u32 %s229, 4
          %236 = dma.hbm_to_vmem [thread:$0]  (%p226), %s228, %s232, %s231, %s214, 128, 128, 8
        $region32: #{update_function.1} parent=27 // pred_fallthru
          _
        // Predicated region
        $region33: #{update_function.1} parent=27 // pred_check
          %p237 = pneg %p67
        $region34: #{update_function.1} parent=27 // pred_check_branch
          %239 = sbr.rel (%p237) target = $region36
        $region35: #{update_function.1} parent=27 // pred_region
          %s240 = sand.u32 %s21, 1
          %s241 = scalar_lea.sflag [#allocation6], %s240
          %s242 = sand.u32 %s57, 1
          %s243 = smul.addr %s242, 104
          %s244 = scalar_lea.vmem [#allocation5], %s243
          %s245 = smul.u32 13, %s21
          %s246 = ssub.s32 25, %s245
          %p247 = scmp.lt.s32.totalorder %s246, 13
          %s248 = scalar_select %p247, %s246, 13
          %s249 = smul.u32 128, %s248
          %s251 = ssub.s32 1664, %s249
          %252 = vsyncadd %s241, %s251
          %p253 = scmp.ne.s32.totalorder 0, %s249
          %s254 = smul.addr %s245, 128
          %s255 = scalar_lea.hbm %s1, %s254
          %s256 = smul.u32 8, %s248
          %s257 = sshll.u32 %s244, 4
          %s258 = int_to_ptr.vmem [resolvable:$true] %s257
          %s259 = sshll.u32 %s256, 4
          %263 = dma.hbm_to_vmem [thread:$0]  (%p253), %s255, %s259, %s258, %s241, 128, 128, 8
        $region36: #{update_function.1} parent=27 // pred_fallthru
          _
      $region28: #{update_function.1} parent=5 // pred_fallthru
        _
      %p264 = scmp.le.s32.totalorder 1, %s21
      %p265 = scmp.lt.s32.totalorder %s21, 3
      %p266 = pnand %p264, %p265
      %p267 = pneg %p266
      // Predicated region
      $region37: #{update_function.1} parent=5 // pred_check
        _
      $region38: #{update_function.1} parent=5 // pred_check_branch
        %269 = sbr.rel (%p266) target = $region40
      $region39: #{update_function.1} parent=5 // pred_region
        %s270 = ssub.s32 %s21, 1
        %s271 = sand.u32 %s34, 1
        %s272 = scalar_lea.sflag [#allocation3], %s271
        %s273 = sand.u32 %s34, 1
        %s274 = smul.addr %s273, 104
        %s275 = scalar_lea.vmem [#allocation2], %s274
        // Predicated region
        $region41: #{update_function.1} parent=39 // pred_check
          %p276 = pneg %p47
        $region42: #{update_function.1} parent=39 // pred_check_branch
          %278 = sbr.rel (%p276) target = $region44
        $region43: #{update_function.1} parent=39 // pred_region
          %279 = dma.done %s272, 1664
        $region44: #{update_function.1} parent=39 // pred_fallthru
          _
        %s280 = sand.u32 %s26, 1
        %s281 = scalar_lea.sflag [#allocation6], %s280
        %s282 = sand.u32 %s60, 1
        %s283 = smul.addr %s282, 104
        %s284 = scalar_lea.vmem [#allocation5], %s283
        // Predicated region
        $region45: #{update_function.1} parent=39 // pred_check
          %p285 = pneg %p73
        $region46: #{update_function.1} parent=39 // pred_check_branch
          %287 = sbr.rel (%p285) target = $region48
        $region47: #{update_function.1} parent=39 // pred_region
          %288 = dma.done %s281, 1664
        $region48: #{update_function.1} parent=39 // pred_fallthru
          _
        // Predicated region
        $region49: #{update_function.1} parent=39 // pred_check
          %p289 = pneg %p94
        $region50: #{update_function.1} parent=39 // pred_check_branch
          %291 = sbr.rel (%p289) target = $region52
        $region51: #{update_function.1} parent=39 // pred_region
          %292 = dma.done [#allocation6], 4096
        $region52: #{update_function.1} parent=39 // pred_fallthru
          _
        // Predicated region
        $region53: #{update_function.1} parent=39 // pred_check
          %p293 = pneg %p115
        $region54: #{update_function.1} parent=39 // pred_check_branch
          %295 = sbr.rel (%p293) target = $region56
        $region55: #{update_function.1} parent=39 // pred_region
          %296 = dma.done [#allocation9], 2048
        $region56: #{update_function.1} parent=39 // pred_fallthru
          _
        %s297 = sand.u32 %s34, 1
        %s298 = scalar_lea.sflag [#allocation3], %s297
        %s299 = sand.u32 %s34, 1
        %s300 = smul.addr %s299, 104
        %s301 = scalar_lea.vmem [#allocation2], %s300
        %p302 = pneg %p47
        %p303 = pneg %p44
        %s304 = sand.u32 %s26, 1
        %s305 = scalar_lea.sflag [#allocation6], %s304
        %s306 = sand.u32 %s60, 1
        %s307 = smul.addr %s306, 104
        %s308 = scalar_lea.vmem [#allocation5], %s307
        %p309 = pneg %p73
        %p310 = pneg %p70
        %p311 = pneg %p94
        %p312 = pneg %p91
        %p313 = pneg %p115
        %p314 = pneg %p112
        %p315 = pneg %p136
        %p316 = pneg %p133
        %p317 = pneg %p162
        %p318 = pneg %p159
        %s319 = sand.u32 %s149, 1
        %s320 = scalar_lea.sflag [#allocation4], %s319
        %s321 = sand.u32 %s149, 1
        %s322 = smul.addr %s321, 104
        %s323 = scalar_lea.vmem [#allocation10], %s322
        %s324 = smul.u32 13, %s26
        %s325 = ssub.s32 25, %s324
        %p326 = scmp.lt.s32.totalorder %s325, 13
        %s327 = scalar_select %p326, %s325, 13
        %s328 = smul.u32 128, %s327
        %s329 = smul.u32 13, %s26
        %s330 = ssub.s32 25, %s329
        %p331 = scmp.lt.s32.totalorder %s330, 13
        %s332 = scalar_select %p331, %s330, 13
        %s333 = smul.u32 128, %s332
        %s334 = smul.u32 13, %s26
        %s335 = ssub.s32 25, %s334
        %p336 = scmp.lt.s32.totalorder %s335, 13
        %s337 = scalar_select %p336, %s335, 13
        %s338 = smul.u32 128, %s337
        %v339 = vld [vmem:[%s275] sm:$0xff]
        %v340 = vld [vmem:[%s275 + $0x8] sm:$0xff]
        %v341 = vld [vmem:[%s275 + $0x10] sm:$0xff]
        %v342 = vld [vmem:[%s275 + $0x18] sm:$0xff]
        %v343 = vld [vmem:[%s275 + $0x20] sm:$0xff]
        %v344 = vld [vmem:[%s275 + $0x28] sm:$0xff]
        %v345 = vld [vmem:[%s275 + $0x30] sm:$0xff]
        %v346 = vld [vmem:[%s275 + $0x38] sm:$0xff]
        %v347 = vld [vmem:[%s275 + $0x40] sm:$0xff]
        %v348 = vld [vmem:[%s275 + $0x48] sm:$0xff]
        %v349 = vld [vmem:[%s275 + $0x50] sm:$0xff]
        %v350 = vld [vmem:[%s275 + $0x58] sm:$0xff]
        %v351 = vld [vmem:[%s275 + $0x60] sm:$0xff]
        %v352 = vld [vmem:[%s284] sm:$0xff]
        %v353 = vld [vmem:[%s284 + $0x8] sm:$0xff]
        %v354 = vld [vmem:[%s284 + $0x10] sm:$0xff]
        %v355 = vld [vmem:[%s284 + $0x18] sm:$0xff]
        %v356 = vld [vmem:[%s284 + $0x20] sm:$0xff]
        %v357 = vld [vmem:[%s284 + $0x28] sm:$0xff]
        %v358 = vld [vmem:[%s284 + $0x30] sm:$0xff]
        %v359 = vld [vmem:[%s284 + $0x38] sm:$0xff]
        %v360 = vld [vmem:[%s284 + $0x40] sm:$0xff]
        %v361 = vld [vmem:[%s284 + $0x48] sm:$0xff]
        %v362 = vld [vmem:[%s284 + $0x50] sm:$0xff]
        %v363 = vld [vmem:[%s284 + $0x58] sm:$0xff]
        %v364 = vld [vmem:[%s284 + $0x60] sm:$0xff]
        %v365 = vld [vmem:[#allocation7] sm:$0xff]
        %v366 = vld [vmem:[#allocation7 + $0x8] sm:$0xff]
        %v367 = vld [vmem:[#allocation7 + $0x10] sm:$0xff]
        %v368 = vld [vmem:[#allocation7 + $0x18] sm:$0xff]
        %v369 = vld [vmem:[#allocation7 + $0x20] sm:$0xff]
        %v370 = vld [vmem:[#allocation7 + $0x28] sm:$0xff]
        %v371 = vld [vmem:[#allocation7 + $0x30] sm:$0xff]
        %v372 = vld [vmem:[#allocation7 + $0x38] sm:$0xff]
        %v373 = vld [vmem:[#allocation7 + $0x40] sm:$0xff]
        %v374 = vld [vmem:[#allocation7 + $0x48] sm:$0xff]
        %v375 = vld [vmem:[#allocation7 + $0x50] sm:$0xff]
        %v376 = vld [vmem:[#allocation7 + $0x58] sm:$0xff]
        %v377 = vld [vmem:[#allocation7 + $0x60] sm:$0xff]
        %v378 = vld [vmem:[#allocation7 + $0x68] sm:$0xff]
        %v379 = vld [vmem:[#allocation7 + $0x70] sm:$0xff]
        %v380 = vld [vmem:[#allocation7 + $0x78] sm:$0xff]
        %v381 = vld [vmem:[#allocation7 + $0x80] sm:$0xff]
        %v382 = vld [vmem:[#allocation7 + $0x88] sm:$0xff]
        %v383 = vld [vmem:[#allocation7 + $0x90] sm:$0xff]
        %v384 = vld [vmem:[#allocation7 + $0x98] sm:$0xff]
        %v385 = vld [vmem:[#allocation7 + $0xa0] sm:$0xff]
        %v386 = vld [vmem:[#allocation7 + $0xa8] sm:$0xff]
        %v387 = vld [vmem:[#allocation7 + $0xb0] sm:$0xff]
        %v388 = vld [vmem:[#allocation7 + $0xb8] sm:$0xff]
        %v389 = vld [vmem:[#allocation7 + $0xc0] sm:$0xff]
        %v390 = vld [vmem:[#allocation7 + $0xc8] sm:$0xff]
        %v391 = vld [vmem:[#allocation7 + $0xd0] sm:$0xff]
        %v392 = vld [vmem:[#allocation7 + $0xd8] sm:$0xff]
        %v393 = vld [vmem:[#allocation7 + $0xe0] sm:$0xff]
        %v394 = vld [vmem:[#allocation7 + $0xe8] sm:$0xff]
        %v395 = vld [vmem:[#allocation7 + $0xf0] sm:$0xff]
        %v396 = vld [vmem:[#allocation7 + $0xf8] sm:$0xff]
        %v397 = vld [vmem:[%s4] sm:$0x3]
        %398 = vmatprep.subr.mxu0 0.0
        %399 = vmatpush1.msra.mxu0 %v396
        %400 = vmatprep.subr.mxu0 0.0
        %401 = vmatpush1.msra.mxu0 %v395
        %402 = vmatprep.subr.mxu0 0.0
        %403 = vmatpush1.msra.mxu0 %v394
        %404 = vmatprep.subr.mxu0 0.0
        %405 = vmatpush1.msra.mxu0 %v393
        %406 = vmatprep.subr.mxu0 0.0
        %407 = vmatpush1.msra.mxu0 %v392
        %408 = vmatprep.subr.mxu0 0.0
        %409 = vmatpush1.msra.mxu0 %v391
        %410 = vmatprep.subr.mxu0 0.0
        %411 = vmatpush1.msra.mxu0 %v390
        %412 = vmatprep.subr.mxu0 0.0
        %413 = vmatpush1.msra.mxu0 %v389
        %414 = vmatprep.subr.mxu0 0.0
        %415 = vmatpush1.msra.mxu0 %v388
        %416 = vmatprep.subr.mxu0 0.0
        %417 = vmatpush1.msra.mxu0 %v387
        %418 = vmatprep.subr.mxu0 0.0
        %419 = vmatpush1.msra.mxu0 %v386
        %420 = vmatprep.subr.mxu0 0.0
        %421 = vmatpush1.msra.mxu0 %v385
        %422 = vmatprep.subr.mxu0 0.0
        %423 = vmatpush1.msra.mxu0 %v384
        %424 = vmatprep.subr.mxu0 0.0
        %425 = vmatpush1.msra.mxu0 %v383
        %426 = vmatprep.subr.mxu0 0.0
        %427 = vmatpush1.msra.mxu0 %v382
        %428 = vmatprep.subr.mxu0 0.0
        %429 = vmatpush1.msra.mxu0 %v381
        %430 = vmatprep.subr.mxu0 0.0
        %431 = vmatpush2.msra.mxu0 0.0
        %432 = vmatprep.subr.mxu0 0.0
        %433 = vmatpush2.msra.mxu0 0.0
        %434 = vmatprep.subr.mxu0 0.0
        %435 = vmatpush2.msra.mxu0 0.0
        %436 = vmatprep.subr.mxu0 0.0
        %437 = vmatpush2.msra.mxu0 0.0
        %438 = vmatprep.subr.mxu0 0.0
        %439 = vmatpush2.msra.mxu0 0.0
        %440 = vmatprep.subr.mxu0 0.0
        %441 = vmatpush2.msra.mxu0 0.0
        %442 = vmatprep.subr.mxu0 0.0
        %443 = vmatpush2.msra.mxu0 0.0
        %444 = vmatprep.subr.mxu0 0.0
        %445 = vmatpush2.msra.mxu0 0.0
        %446 = vmatprep.subr.mxu0 0.0
        %447 = vmatpush2.msra.mxu0 0.0
        %448 = vmatprep.subr.mxu0 0.0
        %449 = vmatpush2.msra.mxu0 0.0
        %450 = vmatprep.subr.mxu0 0.0
        %451 = vmatpush2.msra.mxu0 0.0
        %452 = vmatprep.subr.mxu0 0.0
        %453 = vmatpush2.msra.mxu0 0.0
        %454 = vmatprep.subr.mxu0 0.0
        %455 = vmatpush2.msra.mxu0 0.0
        %456 = vmatprep.subr.mxu0 0.0
        %457 = vmatpush2.msra.mxu0 0.0
        %458 = vmatprep.subr.mxu0 0.0
        %459 = vmatpush2.msra.mxu0 0.0
        %460 = vmatprep.subr.mxu0 0.0
        %461 = vmatpush2.msra.mxu0 0.0
        %462 = vmatprep.mubr.f32.mxu0 0.0
        %463 = vmatmul.mubr.f32.gmra.mxu0 %v352
        %v464 = vpop.f32.mrf.mxu0
        %v465 = vadd.f32 0.0, %v464
        %v466 = vpop.f32.mrf.mxu0
        %467 = vmatprep.mubr.f32.mxu0 0.0
        %468 = vmatmul.mubr.f32.gmra.mxu0 %v353
        %v469 = vpop.f32.mrf.mxu0
        %v470 = vadd.f32 0.0, %v469
        %v471 = vpop.f32.mrf.mxu0
        %472 = vmatprep.mubr.f32.mxu0 0.0
        %473 = vmatmul.mubr.f32.gmra.mxu0 %v354
        %v474 = vpop.f32.mrf.mxu0
        %v475 = vadd.f32 0.0, %v474
        %v476 = vpop.f32.mrf.mxu0
        %477 = vmatprep.mubr.f32.mxu0 0.0
        %478 = vmatmul.mubr.f32.gmra.mxu0 %v355
        %v479 = vpop.f32.mrf.mxu0
        %v480 = vadd.f32 0.0, %v479
        %v481 = vpop.f32.mrf.mxu0
        %482 = vmatprep.mubr.f32.mxu0 0.0
        %483 = vmatmul.mubr.f32.gmra.mxu0 %v356
        %v484 = vpop.f32.mrf.mxu0
        %v485 = vadd.f32 0.0, %v484
        %v486 = vpop.f32.mrf.mxu0
        %487 = vmatprep.mubr.f32.mxu0 0.0
        %488 = vmatmul.mubr.f32.gmra.mxu0 %v357
        %v489 = vpop.f32.mrf.mxu0
        %v490 = vadd.f32 0.0, %v489
        %v491 = vpop.f32.mrf.mxu0
        %492 = vmatprep.mubr.f32.mxu0 0.0
        %493 = vmatmul.mubr.f32.gmra.mxu0 %v358
        %v494 = vpop.f32.mrf.mxu0
        %v495 = vadd.f32 0.0, %v494
        %v496 = vpop.f32.mrf.mxu0
        %497 = vmatprep.mubr.f32.mxu0 0.0
        %498 = vmatmul.mubr.f32.gmra.mxu0 %v359
        %v499 = vpop.f32.mrf.mxu0
        %v500 = vadd.f32 0.0, %v499
        %v501 = vpop.f32.mrf.mxu0
        %502 = vmatprep.mubr.f32.mxu0 0.0
        %503 = vmatmul.mubr.f32.gmra.mxu0 %v360
        %v504 = vpop.f32.mrf.mxu0
        %v505 = vadd.f32 0.0, %v504
        %v506 = vpop.f32.mrf.mxu0
        %507 = vmatprep.mubr.f32.mxu0 0.0
        %508 = vmatmul.mubr.f32.gmra.mxu0 %v361
        %v509 = vpop.f32.mrf.mxu0
        %v510 = vadd.f32 0.0, %v509
        %v511 = vpop.f32.mrf.mxu0
        %512 = vmatprep.mubr.f32.mxu0 0.0
        %513 = vmatmul.mubr.f32.gmra.mxu0 %v362
        %v514 = vpop.f32.mrf.mxu0
        %v515 = vadd.f32 0.0, %v514
        %v516 = vpop.f32.mrf.mxu0
        %517 = vmatprep.mubr.f32.mxu0 0.0
        %518 = vmatmul.mubr.f32.gmra.mxu0 %v363
        %v519 = vpop.f32.mrf.mxu0
        %v520 = vadd.f32 0.0, %v519
        %v521 = vpop.f32.mrf.mxu0
        %522 = vmatprep.mubr.f32.mxu0 0.0
        %523 = vmatmul.mubr.f32.gmra.mxu0 %v364
        %v524 = vpop.f32.mrf.mxu0
        %v525 = vadd.f32 0.0, %v524
        %v526 = vpop.f32.mrf.mxu0
        %527 = vdwg.mxu0
        %528 = vmatprep.subr.mxu0 0.0
        %529 = vmatpush1.msra.mxu0 %v380
        %530 = vmatprep.subr.mxu0 0.0
        %531 = vmatpush1.msra.mxu0 %v379
        %532 = vmatprep.subr.mxu0 0.0
        %533 = vmatpush1.msra.mxu0 %v378
        %534 = vmatprep.subr.mxu0 0.0
        %535 = vmatpush1.msra.mxu0 %v377
        %536 = vmatprep.subr.mxu0 0.0
        %537 = vmatpush1.msra.mxu0 %v376
        %538 = vmatprep.subr.mxu0 0.0
        %539 = vmatpush1.msra.mxu0 %v375
        %540 = vmatprep.subr.mxu0 0.0
        %541 = vmatpush1.msra.mxu0 %v374
        %542 = vmatprep.subr.mxu0 0.0
        %543 = vmatpush1.msra.mxu0 %v373
        %544 = vmatprep.subr.mxu0 0.0
        %545 = vmatpush1.msra.mxu0 %v372
        %546 = vmatprep.subr.mxu0 0.0
        %547 = vmatpush1.msra.mxu0 %v371
        %548 = vmatprep.subr.mxu0 0.0
        %549 = vmatpush1.msra.mxu0 %v370
        %550 = vmatprep.subr.mxu0 0.0
        %551 = vmatpush1.msra.mxu0 %v369
        %552 = vmatprep.subr.mxu0 0.0
        %553 = vmatpush1.msra.mxu0 %v368
        %554 = vmatprep.subr.mxu0 0.0
        %555 = vmatpush1.msra.mxu0 %v367
        %556 = vmatprep.subr.mxu0 0.0
        %557 = vmatpush1.msra.mxu0 %v366
        %558 = vmatprep.subr.mxu0 0.0
        %559 = vmatpush1.msra.mxu0 %v365
        %560 = vmatprep.subr.mxu0 0.0
        %561 = vmatpush2.msra.mxu0 0.0
        %562 = vmatprep.subr.mxu0 0.0
        %563 = vmatpush2.msra.mxu0 0.0
        %564 = vmatprep.subr.mxu0 0.0
        %565 = vmatpush2.msra.mxu0 0.0
        %566 = vmatprep.subr.mxu0 0.0
        %567 = vmatpush2.msra.mxu0 0.0
        %568 = vmatprep.subr.mxu0 0.0
        %569 = vmatpush2.msra.mxu0 0.0
        %570 = vmatprep.subr.mxu0 0.0
        %571 = vmatpush2.msra.mxu0 0.0
        %572 = vmatprep.subr.mxu0 0.0
        %573 = vmatpush2.msra.mxu0 0.0
        %574 = vmatprep.subr.mxu0 0.0
        %575 = vmatpush2.msra.mxu0 0.0
        %576 = vmatprep.subr.mxu0 0.0
        %577 = vmatpush2.msra.mxu0 0.0
        %578 = vmatprep.subr.mxu0 0.0
        %579 = vmatpush2.msra.mxu0 0.0
        %580 = vmatprep.subr.mxu0 0.0
        %581 = vmatpush2.msra.mxu0 0.0
        %582 = vmatprep.subr.mxu0 0.0
        %583 = vmatpush2.msra.mxu0 0.0
        %584 = vmatprep.subr.mxu0 0.0
        %585 = vmatpush2.msra.mxu0 0.0
        %586 = vmatprep.subr.mxu0 0.0
        %587 = vmatpush2.msra.mxu0 0.0
        %588 = vmatprep.subr.mxu0 0.0
        %589 = vmatpush2.msra.mxu0 0.0
        %590 = vmatprep.subr.mxu0 0.0
        %591 = vmatpush2.msra.mxu0 0.0
        %592 = vmatprep.mubr.f32.mxu0 0.0
        %593 = vmatmul.mubr.f32.gmra.mxu0 %v339
        %v594 = vpop.f32.mrf.mxu0
        %v595 = vadd.f32 %v465, %v594
        %v596 = vpop.f32.mrf.mxu0
        %597 = vmatprep.mubr.f32.mxu0 0.0
        %598 = vmatmul.mubr.f32.gmra.mxu0 %v340
        %v599 = vpop.f32.mrf.mxu0
        %v600 = vadd.f32 %v470, %v599
        %v601 = vpop.f32.mrf.mxu0
        %602 = vmatprep.mubr.f32.mxu0 0.0
        %603 = vmatmul.mubr.f32.gmra.mxu0 %v341
        %v604 = vpop.f32.mrf.mxu0
        %v605 = vadd.f32 %v475, %v604
        %v606 = vpop.f32.mrf.mxu0
        %607 = vmatprep.mubr.f32.mxu0 0.0
        %608 = vmatmul.mubr.f32.gmra.mxu0 %v342
        %v609 = vpop.f32.mrf.mxu0
        %v610 = vadd.f32 %v480, %v609
        %v611 = vpop.f32.mrf.mxu0
        %612 = vmatprep.mubr.f32.mxu0 0.0
        %613 = vmatmul.mubr.f32.gmra.mxu0 %v343
        %v614 = vpop.f32.mrf.mxu0
        %v615 = vadd.f32 %v485, %v614
        %v616 = vpop.f32.mrf.mxu0
        %617 = vmatprep.mubr.f32.mxu0 0.0
        %618 = vmatmul.mubr.f32.gmra.mxu0 %v344
        %v619 = vpop.f32.mrf.mxu0
        %v620 = vadd.f32 %v490, %v619
        %v621 = vpop.f32.mrf.mxu0
        %622 = vmatprep.mubr.f32.mxu0 0.0
        %623 = vmatmul.mubr.f32.gmra.mxu0 %v345
        %v624 = vpop.f32.mrf.mxu0
        %v625 = vadd.f32 %v495, %v624
        %v626 = vpop.f32.mrf.mxu0
        %627 = vmatprep.mubr.f32.mxu0 0.0
        %628 = vmatmul.mubr.f32.gmra.mxu0 %v346
        %v629 = vpop.f32.mrf.mxu0
        %v630 = vadd.f32 %v500, %v629
        %v631 = vpop.f32.mrf.mxu0
        %632 = vmatprep.mubr.f32.mxu0 0.0
        %633 = vmatmul.mubr.f32.gmra.mxu0 %v347
        %v634 = vpop.f32.mrf.mxu0
        %v635 = vadd.f32 %v505, %v634
        %v636 = vpop.f32.mrf.mxu0
        %637 = vmatprep.mubr.f32.mxu0 0.0
        %638 = vmatmul.mubr.f32.gmra.mxu0 %v348
        %v639 = vpop.f32.mrf.mxu0
        %v640 = vadd.f32 %v510, %v639
        %v641 = vpop.f32.mrf.mxu0
        %642 = vmatprep.mubr.f32.mxu0 0.0
        %643 = vmatmul.mubr.f32.gmra.mxu0 %v349
        %v644 = vpop.f32.mrf.mxu0
        %v645 = vadd.f32 %v515, %v644
        %v646 = vpop.f32.mrf.mxu0
        %647 = vmatprep.mubr.f32.mxu0 0.0
        %648 = vmatmul.mubr.f32.gmra.mxu0 %v350
        %v649 = vpop.f32.mrf.mxu0
        %v650 = vadd.f32 %v520, %v649
        %v651 = vpop.f32.mrf.mxu0
        %652 = vmatprep.mubr.f32.mxu0 0.0
        %653 = vmatmul.mubr.f32.gmra.mxu0 %v351
        %v654 = vpop.f32.mrf.mxu0
        %v655 = vadd.f32 %v525, %v654
        %v656 = vpop.f32.mrf.mxu0
        %657 = vdwg.mxu0
        %v658 = vlaneseq
        %v659 = vshrl.u32 %v658, 7
        %v660 = vsub.s32 0, %v659
        %v661 = vrot.slane %v397, %v660
        %v662 = vadd.f32 %v595, %v661
        %v663 = vadd.f32 %v600, %v661
        %v664 = vadd.f32 %v605, %v661
        %v665 = vadd.f32 %v610, %v661
        %v666 = vadd.f32 %v615, %v661
        %v667 = vadd.f32 %v620, %v661
        %v668 = vadd.f32 %v625, %v661
        %v669 = vadd.f32 %v630, %v661
        %v670 = vadd.f32 %v635, %v661
        %v671 = vadd.f32 %v640, %v661
        %v672 = vadd.f32 %v645, %v661
        %v673 = vadd.f32 %v650, %v661
        %v674 = vadd.f32 %v655, %v661
        %v675 = vmax.f32 %v662, 0.0
        %v676 = vmax.f32 %v663, 0.0
        %v677 = vmax.f32 %v664, 0.0
        %v678 = vmax.f32 %v665, 0.0
        %v679 = vmax.f32 %v666, 0.0
        %v680 = vmax.f32 %v667, 0.0
        %v681 = vmax.f32 %v668, 0.0
        %v682 = vmax.f32 %v669, 0.0
        %v683 = vmax.f32 %v670, 0.0
        %v684 = vmax.f32 %v671, 0.0
        %v685 = vmax.f32 %v672, 0.0
        %v686 = vmax.f32 %v673, 0.0
        %v687 = vmax.f32 %v674, 0.0
        %v688 = vld [vmem:[#allocation8] sm:$0xff]
        %v689 = vld [vmem:[#allocation8 + $0x8] sm:$0xff]
        %v690 = vld [vmem:[#allocation8 + $0x10] sm:$0xff]
        %v691 = vld [vmem:[#allocation8 + $0x18] sm:$0xff]
        %v692 = vld [vmem:[#allocation8 + $0x20] sm:$0xff]
        %v693 = vld [vmem:[#allocation8 + $0x28] sm:$0xff]
        %v694 = vld [vmem:[#allocation8 + $0x30] sm:$0xff]
        %v695 = vld [vmem:[#allocation8 + $0x38] sm:$0xff]
        %v696 = vld [vmem:[#allocation8 + $0x40] sm:$0xff]
        %v697 = vld [vmem:[#allocation8 + $0x48] sm:$0xff]
        %v698 = vld [vmem:[#allocation8 + $0x50] sm:$0xff]
        %v699 = vld [vmem:[#allocation8 + $0x58] sm:$0xff]
        %v700 = vld [vmem:[#allocation8 + $0x60] sm:$0xff]
        %v701 = vld [vmem:[#allocation8 + $0x68] sm:$0xff]
        %v702 = vld [vmem:[#allocation8 + $0x70] sm:$0xff]
        %v703 = vld [vmem:[#allocation8 + $0x78] sm:$0xff]
        %v704 = vlaneseq
        %v705 = vshrl.u32 %v704, 7
        %v706 = vsub.s32 1, %v705
        %v707 = vrot.slane %v397, %v706
        %708 = vmatprep.subr.mxu0 0.0
        %709 = vmatpush1.msra.mxu0 %v703
        %710 = vmatprep.subr.mxu0 0.0
        %711 = vmatpush1.msra.mxu0 %v702
        %712 = vmatprep.subr.mxu0 0.0
        %713 = vmatpush1.msra.mxu0 %v701
        %714 = vmatprep.subr.mxu0 0.0
        %715 = vmatpush1.msra.mxu0 %v700
        %716 = vmatprep.subr.mxu0 0.0
        %717 = vmatpush1.msra.mxu0 %v699
        %718 = vmatprep.subr.mxu0 0.0
        %719 = vmatpush1.msra.mxu0 %v698
        %720 = vmatprep.subr.mxu0 0.0
        %721 = vmatpush1.msra.mxu0 %v697
        %722 = vmatprep.subr.mxu0 0.0
        %723 = vmatpush1.msra.mxu0 %v696
        %724 = vmatprep.subr.mxu0 0.0
        %725 = vmatpush1.msra.mxu0 %v695
        %726 = vmatprep.subr.mxu0 0.0
        %727 = vmatpush1.msra.mxu0 %v694
        %728 = vmatprep.subr.mxu0 0.0
        %729 = vmatpush1.msra.mxu0 %v693
        %730 = vmatprep.subr.mxu0 0.0
        %731 = vmatpush1.msra.mxu0 %v692
        %732 = vmatprep.subr.mxu0 0.0
        %733 = vmatpush1.msra.mxu0 %v691
        %734 = vmatprep.subr.mxu0 0.0
        %735 = vmatpush1.msra.mxu0 %v690
        %736 = vmatprep.subr.mxu0 0.0
        %737 = vmatpush1.msra.mxu0 %v689
        %738 = vmatprep.subr.mxu0 0.0
        %739 = vmatpush1.msra.mxu0 %v688
        %740 = vmatprep.subr.mxu0 0.0
        %741 = vmatpush2.msra.mxu0 0.0
        %742 = vmatprep.subr.mxu0 0.0
        %743 = vmatpush2.msra.mxu0 0.0
        %744 = vmatprep.subr.mxu0 0.0
        %745 = vmatpush2.msra.mxu0 0.0
        %746 = vmatprep.subr.mxu0 0.0
        %747 = vmatpush2.msra.mxu0 0.0
        %748 = vmatprep.subr.mxu0 0.0
        %749 = vmatpush2.msra.mxu0 0.0
        %750 = vmatprep.subr.mxu0 0.0
        %751 = vmatpush2.msra.mxu0 0.0
        %752 = vmatprep.subr.mxu0 0.0
        %753 = vmatpush2.msra.mxu0 0.0
        %754 = vmatprep.subr.mxu0 0.0
        %755 = vmatpush2.msra.mxu0 0.0
        %756 = vmatprep.subr.mxu0 0.0
        %757 = vmatpush2.msra.mxu0 0.0
        %758 = vmatprep.subr.mxu0 0.0
        %759 = vmatpush2.msra.mxu0 0.0
        %760 = vmatprep.subr.mxu0 0.0
        %761 = vmatpush2.msra.mxu0 0.0
        %762 = vmatprep.subr.mxu0 0.0
        %763 = vmatpush2.msra.mxu0 0.0
        %764 = vmatprep.subr.mxu0 0.0
        %765 = vmatpush2.msra.mxu0 0.0
        %766 = vmatprep.subr.mxu0 0.0
        %767 = vmatpush2.msra.mxu0 0.0
        %768 = vmatprep.subr.mxu0 0.0
        %769 = vmatpush2.msra.mxu0 0.0
        %770 = vmatprep.subr.mxu0 0.0
        %771 = vmatpush2.msra.mxu0 0.0
        %772 = vmatprep.mubr.f32.mxu0 0.0
        %773 = vmatmul.mubr.f32.gmra.mxu0 %v675
        %v774 = vpop.f32.mrf.mxu0
        %v775 = vadd.f32 %v707, %v774
        %v776 = vpop.f32.mrf.mxu0
        %777 = vmatprep.mubr.f32.mxu0 0.0
        %778 = vmatmul.mubr.f32.gmra.mxu0 %v676
        %v779 = vpop.f32.mrf.mxu0
        %v780 = vadd.f32 %v707, %v779
        %v781 = vpop.f32.mrf.mxu0
        %782 = vmatprep.mubr.f32.mxu0 0.0
        %783 = vmatmul.mubr.f32.gmra.mxu0 %v677
        %v784 = vpop.f32.mrf.mxu0
        %v785 = vadd.f32 %v707, %v784
        %v786 = vpop.f32.mrf.mxu0
        %787 = vmatprep.mubr.f32.mxu0 0.0
        %788 = vmatmul.mubr.f32.gmra.mxu0 %v678
        %v789 = vpop.f32.mrf.mxu0
        %v790 = vadd.f32 %v707, %v789
        %v791 = vpop.f32.mrf.mxu0
        %792 = vmatprep.mubr.f32.mxu0 0.0
        %793 = vmatmul.mubr.f32.gmra.mxu0 %v679
        %v794 = vpop.f32.mrf.mxu0
        %v795 = vadd.f32 %v707, %v794
        %v796 = vpop.f32.mrf.mxu0
        %797 = vmatprep.mubr.f32.mxu0 0.0
        %798 = vmatmul.mubr.f32.gmra.mxu0 %v680
        %v799 = vpop.f32.mrf.mxu0
        %v800 = vadd.f32 %v707, %v799
        %v801 = vpop.f32.mrf.mxu0
        %802 = vmatprep.mubr.f32.mxu0 0.0
        %803 = vmatmul.mubr.f32.gmra.mxu0 %v681
        %v804 = vpop.f32.mrf.mxu0
        %v805 = vadd.f32 %v707, %v804
        %v806 = vpop.f32.mrf.mxu0
        %807 = vmatprep.mubr.f32.mxu0 0.0
        %808 = vmatmul.mubr.f32.gmra.mxu0 %v682
        %v809 = vpop.f32.mrf.mxu0
        %v810 = vadd.f32 %v707, %v809
        %v811 = vpop.f32.mrf.mxu0
        %812 = vmatprep.mubr.f32.mxu0 0.0
        %813 = vmatmul.mubr.f32.gmra.mxu0 %v683
        %v814 = vpop.f32.mrf.mxu0
        %v815 = vadd.f32 %v707, %v814
        %v816 = vpop.f32.mrf.mxu0
        %817 = vmatprep.mubr.f32.mxu0 0.0
        %818 = vmatmul.mubr.f32.gmra.mxu0 %v684
        %v819 = vpop.f32.mrf.mxu0
        %v820 = vadd.f32 %v707, %v819
        %v821 = vpop.f32.mrf.mxu0
        %822 = vmatprep.mubr.f32.mxu0 0.0
        %823 = vmatmul.mubr.f32.gmra.mxu0 %v685
        %v824 = vpop.f32.mrf.mxu0
        %v825 = vadd.f32 %v707, %v824
        %v826 = vpop.f32.mrf.mxu0
        %827 = vmatprep.mubr.f32.mxu0 0.0
        %828 = vmatmul.mubr.f32.gmra.mxu0 %v686
        %v829 = vpop.f32.mrf.mxu0
        %v830 = vadd.f32 %v707, %v829
        %v831 = vpop.f32.mrf.mxu0
        %832 = vmatprep.mubr.f32.mxu0 0.0
        %833 = vmatmul.mubr.f32.gmra.mxu0 %v687
        %v834 = vpop.f32.mrf.mxu0
        %v835 = vadd.f32 %v707, %v834
        %v836 = vpop.f32.mrf.mxu0
        %837 = vdwg.mxu0
        %838 = vst [vmem:[%s323] sm:$0xff] %v775
        %839 = vst [vmem:[%s323 + $0x8] sm:$0xff] %v780
        %840 = vst [vmem:[%s323 + $0x10] sm:$0xff] %v785
        %841 = vst [vmem:[%s323 + $0x18] sm:$0xff] %v790
        %842 = vst [vmem:[%s323 + $0x20] sm:$0xff] %v795
        %843 = vst [vmem:[%s323 + $0x28] sm:$0xff] %v800
        %844 = vst [vmem:[%s323 + $0x30] sm:$0xff] %v805
        %845 = vst [vmem:[%s323 + $0x38] sm:$0xff] %v810
        %846 = vst [vmem:[%s323 + $0x40] sm:$0xff] %v815
        %847 = vst [vmem:[%s323 + $0x48] sm:$0xff] %v820
        %848 = vst [vmem:[%s323 + $0x50] sm:$0xff] %v825
        %849 = vst [vmem:[%s323 + $0x58] sm:$0xff] %v830
        %850 = vst [vmem:[%s323 + $0x60] sm:$0xff] %v835
        %s851 = sand.u32 %s149, 1
        %s852 = scalar_lea.sflag [#allocation4], %s851
        %s853 = sand.u32 %s149, 1
        %s854 = smul.addr %s853, 104
        %s855 = scalar_lea.vmem [#allocation10], %s854
        // Predicated region
        $region57: #{update_function.1} parent=39 // pred_check
          %p856 = pneg %p159
        $region58: #{update_function.1} parent=39 // pred_check_branch
          %858 = sbr.rel (%p856) target = $region60
        $region59: #{update_function.1} parent=39 // pred_region
          %s859 = smul.u32 13, %s26
          %s860 = ssub.s32 25, %s859
          %p861 = scmp.lt.s32.totalorder %s860, 13
          %s862 = scalar_select %p861, %s860, 13
          %s863 = smul.u32 128, %s862
          %s865 = ssub.s32 1664, %s863
          %866 = vsyncadd %s852, %s865
          %p867 = scmp.ne.s32.totalorder 0, %s863
          %s868 = smul.addr %s859, 128
          %s869 = scalar_lea.hbm %s5, %s868
          %s870 = smul.u32 8, %s862
          %s871 = sshll.u32 %s855, 4
          %s872 = int_to_ptr.vmem [resolvable:$true] %s871
          %s873 = sshll.u32 %s870, 4
          %877 = dma.vmem_to_hbm [thread:$0]  (%p867), %s872, %s873, %s869, %s852, 128, 128, 8
        $region60: #{update_function.1} parent=39 // pred_fallthru
          _
      $region40: #{update_function.1} parent=5 // pred_fallthru
        _
      %p878 = scmp.le.s32.totalorder 2, %s21
      // Predicated region
      $region61: #{update_function.1} parent=5 // pred_check
        %p879 = pneg %p878
      $region62: #{update_function.1} parent=5 // pred_check_branch
        %881 = sbr.rel (%p879) target = $region64
      $region63: #{update_function.1} parent=5 // pred_region
        %s882 = ssub.s32 %s21, 2
        // Predicated region
        $region65: #{update_function.1} parent=63 // pred_check
          %p883 = pneg %p165
        $region66: #{update_function.1} parent=63 // pred_check_branch
          %885 = sbr.rel (%p883) target = $region68
        $region67: #{update_function.1} parent=63 // pred_region
          %s886 = sand.u32 %s150, 1
          %s887 = scalar_lea.sflag [#allocation4], %s886
          %s888 = sand.u32 %s150, 1
          %s889 = smul.addr %s888, 104
          %s890 = scalar_lea.vmem [#allocation10], %s889
          %891 = dma.done %s887, 1664
        $region68: #{update_function.1} parent=63 // pred_fallthru
          _
      $region64: #{update_function.1} parent=5 // pred_fallthru
        _
    $region6: #{update_function.1} parent=1 // loop_footer
      %s25 = sadd.s32 1, %s21
    $region7: #{update_function.1} parent=1 // loop_footer_branch
      %20 = sbr.rel target = $region3
    $region8: #{update_function.1} parent=1 // loop_exit
      _
    %892 = vsyncpa [#allocation3], 1
    %s893 = scalar_lea.sflag [#allocation3], 1
    %894 = vsyncpa %s893, 1
    %895 = vsyncpa [#allocation6], 1
    %s896 = scalar_lea.sflag [#allocation6], 1
    %897 = vsyncpa %s896, 1
    %898 = vsyncpa [#allocation9], 1
    %899 = vsyncpa [#allocation4], 1
    %s900 = scalar_lea.sflag [#allocation4], 1
    %901 = vsyncpa %s900, 1

</llo_original>
